<compile_context>
chip_gen: v5e
topology: v5e:2x2
jax: 0.10.0
libtpu: 0.0.40
codegen_flags: <defaults>
</compile_context>

<pallas_src>
import jax
import jax.numpy as jnp
from jax.experimental import pallas as pl
from jax.experimental.pallas import tpu as pltpu


_LANE_COLS = 512          # lane-dense last dim (multiple of 128)
_NUM_CORE_SPLIT = 2       # leading "parallel" grid axis (2 TCs on v7x)


def _round_up(x, m):
    return ((x + m - 1) // m) * m


def _mask_l1_kernel(pred_ref, gt_ref, mask_ref, out_ref, acc_ref):
    i = pl.program_id(1)

    # Zero the per-core accumulator at the start of this core's row range.
    @pl.when(i == 0)
    def _():
        acc_ref[...] = jnp.zeros_like(acc_ref)

    # Cast inside the kernel (keeps bf16 inputs cheap on the HBM side while
    # accumulating in f32 on every generation).
    p = pred_ref[...].astype(jnp.float32)
    g = gt_ref[...].astype(jnp.float32)
    m = mask_ref[...].astype(jnp.float32)

    masked_abs = jnp.abs(p - g) * m                       # (block_rows, cols)

    # Sublane reduction to (1, cols): bulk of the work is plain VALU vreg
    # adds; the full cross-lane reduce happens once, outside the hot loop.
    acc_ref[0:1, :] += jnp.sum(masked_abs, axis=0, keepdims=True)
    acc_ref[1:2, :] += jnp.sum(m, axis=0, keepdims=True)

    # Publish this core's partial sums on its last step.
    @pl.when(i == pl.num_programs(1) - 1)
    def _():
        out_ref[...] = acc_ref[...]


def mask_l1_loss(pred, gt, mask):
    """pred: (N, C, H, W); gt, mask: (N, H, W). Returns scalar f32 loss."""
    N, C, H, W = pred.shape
    assert gt.shape == (N, H, W) and mask.shape == (N, H, W)

    cols = _LANE_COLS
    total = N * H * W

    # ---- generation-aware tile sizing -------------------------------------
    try:
        vmem_cap = int(pltpu.get_tpu_info().vmem_capacity_bytes)
    except Exception:
        vmem_cap = 64 << 20                       # conservative (v7x) fallback
    vmem_budget = min(vmem_cap // 4, 32 << 20)    # 3 inputs x 2 pipeline bufs
    max_block_rows = max(8, (vmem_budget // (3 * 2 * cols * 4)) // 8 * 8)

    rows_needed = pl.cdiv(total, cols)
    rows_per_core = pl.cdiv(rows_needed, _NUM_CORE_SPLIT)
    # Balance block size vs. padding: pick the block count first, then the
    # smallest multiple-of-8 block that covers each core's row range.
    blocks_per_core = max(1, pl.cdiv(rows_per_core, max_block_rows))
    block_rows = max(8, _round_up(pl.cdiv(rows_per_core, blocks_per_core), 8))
    total_rows = _NUM_CORE_SPLIT * blocks_per_core * block_rows
    padded = total_rows * cols

    # ---- lane-dense flattening (pad with zeros; mask pad = 0 contributes 0)
    def _prep(x):
        x = x.reshape(-1)
        if x.dtype not in (jnp.float32, jnp.bfloat16):
            x = x.astype(jnp.float32)
        if padded != total:
            x = jnp.pad(x, (0, padded - total))
        return x.reshape(total_rows, cols)

    # TODO(synk): for W >= 128 the channel-0 slice could instead be folded
    # into the BlockSpec (pl.Squeezed channel pinned to 0) to avoid this
    # wrapper-side copy; with small W the lane-dense flattening wins.
    pred2 = _prep(pred[:, 0])
    gt2 = _prep(gt)
    mask2 = _prep(mask)

    block_bytes = block_rows * cols * 4
    vmem_limit = int(min(vmem_cap - (8 << 20),
                         max(32 << 20, 3 * 2 * block_bytes + (8 << 20))))

    row_spec = pl.BlockSpec(
        (block_rows, cols),
        lambda c, i: (c * blocks_per_core + i, 0),
    )
    out_spec = pl.BlockSpec((None, 2, cols), lambda c, i: (c, 0, 0))

    partials = pl.pallas_call(
        _mask_l1_kernel,
        out_shape=jax.ShapeDtypeStruct((_NUM_CORE_SPLIT, 2, cols), jnp.float32),
        grid_spec=pltpu.PrefetchScalarGridSpec(
            num_scalar_prefetch=0,
            grid=(_NUM_CORE_SPLIT, blocks_per_core),
            in_specs=[row_spec, row_spec, row_spec],
            out_specs=out_spec,
            scratch_shapes=[pltpu.VMEM((2, cols), jnp.float32)],
        ),
        compiler_params=pltpu.CompilerParams(
            dimension_semantics=("parallel", "arbitrary"),
            vmem_limit_bytes=vmem_limit,
        ),
    )(pred2, gt2, mask2)

    # Tiny epilogue reduction over (2 cores x 2 x 512) partials.
    numerator = jnp.sum(partials[:, 0, :])
    mask_sum = jnp.sum(partials[:, 1, :])

    # Data-dependent branch on mask_sum == 0 (PyTorch uses .item(); here a
    # traced select with the same semantics).
    safe_den = jnp.where(mask_sum == 0, jnp.float32(1.0), mask_sum)
    return jnp.where(mask_sum == 0, mask_sum, numerator / safe_den)


if __name__ == "__main__":
    key = jax.random.PRNGKey(0)
    k1, k2, k3 = jax.random.split(key, 3)

    N, C, H, W = 2, 4, 16, 16
    pred = jax.random.normal(k1, (N, C, H, W), dtype=jnp.float32)
    gt = jax.random.normal(k2, (N, H, W), dtype=jnp.float32)
    mask = (jax.random.uniform(k3, (N, H, W)) > 0.5).astype(jnp.float32)

    loss = mask_l1_loss(pred, gt, mask)
    jax.block_until_ready(loss)

    # Reference check (pure JAX) — same semantics as the PyTorch module.
    ref_den = mask.sum()
    ref = jnp.where(
        ref_den == 0,
        ref_den,
        (jnp.abs(pred[:, 0] - gt) * mask).sum()
        / jnp.where(ref_den == 0, 1.0, ref_den),
    )
    assert jnp.allclose(loss, ref, atol=1e-5, rtol=1e-5), (loss, ref)

    # Zero-mask edge case: loss must be exactly 0.
    zero_loss = mask_l1_loss(pred, gt, jnp.zeros_like(mask))
    jax.block_until_ready(zero_loss)
    assert float(zero_loss) == 0.0

    print("KERNEL_OK")
</pallas_src>

<mosaic_0001>
module attributes {stable_mosaic.version = 11 : i64} {
  func.func @_mask_l1_kernel(%arg0: i32, %arg1: i32, %arg2: memref<8x512xf32, #tpu.memory_space<vmem>>, %arg3: memref<8x512xf32, #tpu.memory_space<vmem>>, %arg4: memref<8x512xf32, #tpu.memory_space<vmem>>, %arg5: memref<1x2x512xf32, #tpu.memory_space<vmem>>, %arg6: memref<2x512xf32, #tpu.memory_space<vmem>>) attributes {dimension_semantics = [#tpu.dimension_semantics<parallel>, #tpu.dimension_semantics<arbitrary>], iteration_bounds = array<i64: 2, 1>, scalar_prefetch = 0 : i64, scratch_operands = 1 : i64, tpu.core_type = #tpu.core_type<tc>, window_params = [{transform_indices = @transform_0, window_bounds = array<i64: 8, 512>}, {transform_indices = @transform_1, window_bounds = array<i64: 8, 512>}, {transform_indices = @transform_2, window_bounds = array<i64: 8, 512>}, {transform_indices = @transform_3, window_bounds = array<i64: 1, 2, 512>}]} {
    %c0_i32 = arith.constant 0 : i32
    %0 = arith.cmpi eq, %arg1, %c0_i32 : i32
    %1 = arith.extui %0 : i1 to i32
    %c0_i32_0 = arith.constant 0 : i32
    %2 = arith.cmpi ne, %1, %c0_i32_0 : i32
    scf.if %2 {
      %cst_16 = arith.constant 0.000000e+00 : f32
      %22 = vector.broadcast %cst_16 : f32 to vector<2x512xf32>
      %c0_17 = arith.constant 0 : index
      %c0_18 = arith.constant 0 : index
      %23 = vector.load %arg6[%c0_17, %c0_18] : memref<2x512xf32, #tpu.memory_space<vmem>>, vector<2x512xf32>
      tpu.vector_store %arg6[%c0_17, %c0_18], %22 {strides = array<i32>} : memref<2x512xf32, #tpu.memory_space<vmem>>, vector<2x512xf32>,
    } else {
    }
    %c0 = arith.constant 0 : index
    %c0_1 = arith.constant 0 : index
    %3 = vector.load %arg2[%c0, %c0_1] : memref<8x512xf32, #tpu.memory_space<vmem>>, vector<8x512xf32>
    %c0_2 = arith.constant 0 : index
    %c0_3 = arith.constant 0 : index
    %4 = vector.load %arg3[%c0_2, %c0_3] : memref<8x512xf32, #tpu.memory_space<vmem>>, vector<8x512xf32>
    %c0_4 = arith.constant 0 : index
    %c0_5 = arith.constant 0 : index
    %5 = vector.load %arg4[%c0_4, %c0_5] : memref<8x512xf32, #tpu.memory_space<vmem>>, vector<8x512xf32>
    %6 = arith.subf %3, %4 : vector<8x512xf32>
    %7 = math.absf %6 : vector<8x512xf32>
    %8 = arith.mulf %7, %5 : vector<8x512xf32>
    %c0_6 = arith.constant 0 : index
    %c0_7 = arith.constant 0 : index
    %9 = vector.load %arg6[%c0_6, %c0_7] : memref<2x512xf32, #tpu.memory_space<vmem>>, vector<1x512xf32>
    %cst = arith.constant dense<0.000000e+00> : vector<512xf32>
    %10 = vector.multi_reduction <add>, %8, %cst [0] : vector<8x512xf32> to vector<512xf32>
    %11 = vector.shape_cast %10 : vector<512xf32> to vector<1x512xf32>
    %12 = arith.addf %9, %11 : vector<1x512xf32>
    %c0_8 = arith.constant 0 : index
    %c0_9 = arith.constant 0 : index
    %13 = vector.load %arg6[%c0_8, %c0_9] : memref<2x512xf32, #tpu.memory_space<vmem>>, vector<1x512xf32>
    tpu.vector_store %arg6[%c0_8, %c0_9], %12 {strides = array<i32>} : memref<2x512xf32, #tpu.memory_space<vmem>>, vector<1x512xf32>,
    %c1 = arith.constant 1 : index
    %c0_10 = arith.constant 0 : index
    %14 = vector.load %arg6[%c1, %c0_10] : memref<2x512xf32, #tpu.memory_space<vmem>>, vector<1x512xf32>
    %cst_11 = arith.constant dense<0.000000e+00> : vector<512xf32>
    %15 = vector.multi_reduction <add>, %5, %cst_11 [0] : vector<8x512xf32> to vector<512xf32>
    %16 = vector.shape_cast %15 : vector<512xf32> to vector<1x512xf32>
    %17 = arith.addf %14, %16 : vector<1x512xf32>
    %c1_12 = arith.constant 1 : index
    %c0_13 = arith.constant 0 : index
    %18 = vector.load %arg6[%c1_12, %c0_13] : memref<2x512xf32, #tpu.memory_space<vmem>>, vector<1x512xf32>
    tpu.vector_store %arg6[%c1_12, %c0_13], %17 {strides = array<i32>} : memref<2x512xf32, #tpu.memory_space<vmem>>, vector<1x512xf32>,
    %c0_i32_14 = arith.constant 0 : i32
    %19 = arith.cmpi eq, %arg1, %c0_i32_14 : i32
    %20 = arith.extui %19 : i1 to i32
    %c0_i32_15 = arith.constant 0 : i32
    %21 = arith.cmpi ne, %20, %c0_i32_15 : i32
    scf.if %21 {
      %c0_16 = arith.constant 0 : index
      %c0_17 = arith.constant 0 : index
      %22 = vector.load %arg6[%c0_16, %c0_17] : memref<2x512xf32, #tpu.memory_space<vmem>>, vector<2x512xf32>
      %c0_18 = arith.constant 0 : index
      %c0_19 = arith.constant 0 : index
      %c0_20 = arith.constant 0 : index
      %23 = vector.load %arg5[%c0_18, %c0_19, %c0_20] : memref<1x2x512xf32, #tpu.memory_space<vmem>>, vector<1x2x512xf32>
      %24 = vector.shape_cast %23 : vector<1x2x512xf32> to vector<2x512xf32>
      %25 = vector.shape_cast %22 : vector<2x512xf32> to vector<1x2x512xf32>
      tpu.vector_store %arg5[%c0_18, %c0_19, %c0_20], %25 {strides = array<i32>} : memref<1x2x512xf32, #tpu.memory_space<vmem>>, vector<1x2x512xf32>,
    } else {
    }
    return
  }
  func.func @transform_0(%arg0: i32, %arg1: i32) -> (i32, i32) {
    %c1_i32 = arith.constant 1 : i32
    %0 = arith.muli %arg0, %c1_i32 : i32
    %1 = arith.addi %0, %arg1 : i32
    %c0_i32 = arith.constant 0 : i32
    %c0_i32_0 = arith.constant 0 : i32
    return %1, %c0_i32 : i32, i32
  }
  func.func @transform_1(%arg0: i32, %arg1: i32) -> (i32, i32) {
    %c1_i32 = arith.constant 1 : i32
    %0 = arith.muli %arg0, %c1_i32 : i32
    %1 = arith.addi %0, %arg1 : i32
    %c0_i32 = arith.constant 0 : i32
    %c0_i32_0 = arith.constant 0 : i32
    return %1, %c0_i32 : i32, i32
  }
  func.func @transform_2(%arg0: i32, %arg1: i32) -> (i32, i32) {
    %c1_i32 = arith.constant 1 : i32
    %0 = arith.muli %arg0, %c1_i32 : i32
    %1 = arith.addi %0, %arg1 : i32
    %c0_i32 = arith.constant 0 : i32
    %c0_i32_0 = arith.constant 0 : i32
    return %1, %c0_i32 : i32, i32
  }
  func.func @transform_3(%arg0: i32, %arg1: i32) -> (i32, i32, i32) {
    %c0_i32 = arith.constant 0 : i32
    %c0_i32_0 = arith.constant 0 : i32
    %c0_i32_1 = arith.constant 0 : i32
    return %arg0, %c0_i32, %c0_i32_0 : i32, i32, i32
  }
}

</mosaic_0001>

<llo_original>
// kernel: tpu_custom_call.1
$region0: #{tpu_custom_call.1}
  #allocation0 [shape = 'u32[]', space=smem, size = 0x4, offset = 0x4, fixed_abs, tag = 'smem constant byte address 0x4 - core index']
  #allocation1 [shape = 'u32[72,128]{1,0:T(1,128)}', space=vmem, size = 0x9000, scoped, tag = 'internal scratch']
  #allocation2 [shape = 'f32[2,512]{1,0:T(2,128)}', space=vmem, size = 0x1000, scoped, tag = 'scratch operand']
  %s0 = inlined_call_operand.hbm [shape: f32[16,512], index: 0, kind: input, shape index: {}]
  %s1 = inlined_call_operand.hbm [shape: f32[16,512], index: 1, kind: input, shape index: {}]
  %s2 = inlined_call_operand.hbm [shape: f32[16,512], index: 2, kind: input, shape index: {}]
  %s3 = inlined_call_operand.hbm [shape: f32[2,2,512], index: 3, kind: output, shape index: {}]
  %s4 = sld [smem:[#allocation0]]
  $region65: #{tpu_custom_call.1} parent=0
    _
  %s6 = ssub.s32 1, %s4
  %s7 = scalar_select 0, %s6, %s4
  $region1: #{tpu_custom_call.1} parent=0
    #allocation3 [shape = 'u8[32768]{0}', space=vmem, size = 0x8000, scoped, tag = 'input window, operand 0']
    #allocation4 [shape = 's32[2]{0}', space=sflag, size = 0x8, scoped, tag = 'scoped memory for tpu_custom_call.1']
    #allocation5 [shape = 's32[2]{0}', space=sflag, size = 0x8, scoped, tag = 'scoped memory for tpu_custom_call.1']
    #allocation6 [shape = 'u8[32768]{0}', space=vmem, size = 0x8000, scoped, tag = 'input window, operand 1']
    #allocation7 [shape = 's32[2]{0}', space=sflag, size = 0x8, scoped, tag = 'scoped memory for tpu_custom_call.1']
    #allocation8 [shape = 'u8[32768]{0}', space=vmem, size = 0x8000, scoped, tag = 'input window, operand 2']
    #allocation9 [shape = 'u8[8192]{0}', space=vmem, size = 0x2000, scoped, tag = 'output window, operand 0']
    %8 = vsyncpa [#allocation4], 0
    %s9 = scalar_lea.sflag [#allocation4], 1
    %10 = vsyncpa %s9, 0
    %11 = vsyncpa [#allocation7], 0
    %s12 = scalar_lea.sflag [#allocation7], 1
    %13 = vsyncpa %s12, 0
    %14 = vsyncpa [#allocation5], 0
    %s15 = scalar_lea.sflag [#allocation5], 1
    %16 = vsyncpa %s15, 0
    loop: start=0, step=1, limit=4
    $region2: #{tpu_custom_call.1} parent=1 // loop_pre_header
      _
    $region3: #{tpu_custom_call.1} parent=1 // loop_header
      %s18 = sphi 0, %s22
      %p19 = scmp.ge.s32.totalorder %s18, 4
      %s25 = sphi 0, %s37
      %s26 = sphi 0, %s33
      %s27 = sphi 0, %s25
      %s28 = sphi 0, %s26
      %s29 = sphi 0, %s27
      %s30 = sphi 0, %s28
      %s42 = sphi 0, %s44
      %s45 = sphi 0, %s42
      %s46 = sphi 0, %s45
      %s62 = sphi 0, %s46
      %s70 = sphi 0, %s72
      %s73 = sphi 0, %s70
      %s74 = sphi 0, %s73
      %s90 = sphi 0, %s74
      %s98 = sphi 0, %s100
      %s101 = sphi 0, %s98
      %s102 = sphi 0, %s101
      %s118 = sphi 0, %s102
      %s124 = sphi 0, %s126
      %s127 = sphi 0, %s124
      %s128 = sphi 0, %s127
      %s144 = sphi 0, %s128
    $region4: #{tpu_custom_call.1} parent=1 // loop_header_branch
      %21 = sbr.rel (%p19) target = $region8
    $region5: #{tpu_custom_call.1} parent=1 // loop_body
      %s23 = ssub.s32 %s18, 1
      %s24 = ssub.s32 %s18, 2
      %s31 = sadd.s32 1, %s26
      %p32 = scmp.ge.s32.totalorder %s31, 1
      %s33 = scalar_select %p32, 0, %s31
      %s34 = sadd.s32 1, %s25
      %s35 = scalar_select %p32, %s34, %s25
      %p36 = scmp.ge.s32.totalorder %s35, 2
      %s37 = scalar_select %p36, 0, %s35
      %s38 = sadd.s32 %s25, %s26
      %s39 = sadd.s32 %s37, %s33
      %s40 = ssub.s32 %s38, %s39
      %p41 = scmp.eq.s32.totalorder %s40, 0
      %s43 = sadd.s32 %s42, 1
      %s44 = scalar_select %p41, %s42, %s43
      %p47 = pneg %p41
      %p48 = scmp.eq.s32.totalorder %s18, 1
      %p49 = por %p47, %p48
      %p50 = scmp.ne.s32.totalorder %s42, %s45
      %p51 = scmp.eq.s32.totalorder %s18, 0
      %p52 = por %p50, %p51
      %p53 = scmp.ne.s32.totalorder %s42, %s45
      %p54 = scmp.eq.s32.totalorder %s23, 1
      %p55 = por %p53, %p54
      %p56 = scmp.ne.s32.totalorder %s45, %s46
      %p57 = scmp.eq.s32.totalorder %s23, 0
      %p58 = por %p56, %p57
      %p59 = scmp.ne.s32.totalorder %s45, %s46
      %p60 = scmp.eq.s32.totalorder %s24, 1
      %p61 = por %p59, %p60
      %p63 = scmp.ne.s32.totalorder %s46, %s62
      %p64 = scmp.eq.s32.totalorder %s24, 0
      %p65 = por %p63, %p64
      %s66 = sadd.s32 %s25, %s26
      %s67 = sadd.s32 %s37, %s33
      %s68 = ssub.s32 %s66, %s67
      %p69 = scmp.eq.s32.totalorder %s68, 0
      %s71 = sadd.s32 %s70, 1
      %s72 = scalar_select %p69, %s70, %s71
      %p75 = pneg %p69
      %p76 = scmp.eq.s32.totalorder %s18, 1
      %p77 = por %p75, %p76
      %p78 = scmp.ne.s32.totalorder %s70, %s73
      %p79 = scmp.eq.s32.totalorder %s18, 0
      %p80 = por %p78, %p79
      %p81 = scmp.ne.s32.totalorder %s70, %s73
      %p82 = scmp.eq.s32.totalorder %s23, 1
      %p83 = por %p81, %p82
      %p84 = scmp.ne.s32.totalorder %s73, %s74
      %p85 = scmp.eq.s32.totalorder %s23, 0
      %p86 = por %p84, %p85
      %p87 = scmp.ne.s32.totalorder %s73, %s74
      %p88 = scmp.eq.s32.totalorder %s24, 1
      %p89 = por %p87, %p88
      %p91 = scmp.ne.s32.totalorder %s74, %s90
      %p92 = scmp.eq.s32.totalorder %s24, 0
      %p93 = por %p91, %p92
      %s94 = sadd.s32 %s25, %s26
      %s95 = sadd.s32 %s37, %s33
      %s96 = ssub.s32 %s94, %s95
      %p97 = scmp.eq.s32.totalorder %s96, 0
      %s99 = sadd.s32 %s98, 1
      %s100 = scalar_select %p97, %s98, %s99
      %p103 = pneg %p97
      %p104 = scmp.eq.s32.totalorder %s18, 1
      %p105 = por %p103, %p104
      %p106 = scmp.ne.s32.totalorder %s98, %s101
      %p107 = scmp.eq.s32.totalorder %s18, 0
      %p108 = por %p106, %p107
      %p109 = scmp.ne.s32.totalorder %s98, %s101
      %p110 = scmp.eq.s32.totalorder %s23, 1
      %p111 = por %p109, %p110
      %p112 = scmp.ne.s32.totalorder %s101, %s102
      %p113 = scmp.eq.s32.totalorder %s23, 0
      %p114 = por %p112, %p113
      %p115 = scmp.ne.s32.totalorder %s101, %s102
      %p116 = scmp.eq.s32.totalorder %s24, 1
      %p117 = por %p115, %p116
      %p119 = scmp.ne.s32.totalorder %s102, %s118
      %p120 = scmp.eq.s32.totalorder %s24, 0
      %p121 = por %p119, %p120
      %s122 = ssub.s32 %s25, %s37
      %p123 = scmp.eq.s32.totalorder %s122, 0
      %s125 = sadd.s32 %s124, 1
      %s126 = scalar_select %p123, %s124, %s125
      %p129 = pneg %p123
      %p130 = scmp.eq.s32.totalorder %s18, 1
      %p131 = por %p129, %p130
      %p132 = scmp.ne.s32.totalorder %s124, %s127
      %p133 = scmp.eq.s32.totalorder %s18, 0
      %p134 = por %p132, %p133
      %p135 = scmp.ne.s32.totalorder %s124, %s127
      %p136 = scmp.eq.s32.totalorder %s23, 1
      %p137 = por %p135, %p136
      %p138 = scmp.ne.s32.totalorder %s127, %s128
      %p139 = scmp.eq.s32.totalorder %s23, 0
      %p140 = por %p138, %p139
      %p141 = scmp.ne.s32.totalorder %s127, %s128
      %p142 = scmp.eq.s32.totalorder %s24, 1
      %p143 = por %p141, %p142
      %p145 = scmp.ne.s32.totalorder %s128, %s144
      %p146 = scmp.eq.s32.totalorder %s24, 0
      %p147 = por %p145, %p146
      %p148 = scmp.le.s32.totalorder 1, %s18
      %p149 = scmp.lt.s32.totalorder %s18, 3
      %p150 = pnand %p148, %p149
      %p151 = pneg %p150
      // Predicated region
      $region9: #{tpu_custom_call.1} parent=5 // pred_check
        _
      $region10: #{tpu_custom_call.1} parent=5 // pred_check_branch
        %153 = sbr.rel (%p150) target = $region12
      $region11: #{tpu_custom_call.1} parent=5 // pred_region
        %s154 = ssub.s32 %s18, 1
      $region12: #{tpu_custom_call.1} parent=5 // pred_fallthru
        _
      %p155 = scmp.lt.s32.totalorder %s18, 2
      // Predicated region
      $region13: #{tpu_custom_call.1} parent=5 // pred_check
        %p156 = pneg %p155
      $region14: #{tpu_custom_call.1} parent=5 // pred_check_branch
        %158 = sbr.rel (%p156) target = $region16
      $region15: #{tpu_custom_call.1} parent=5 // pred_region
        // Predicated region
        $region17: #{tpu_custom_call.1} parent=15 // pred_check
          %p159 = pneg %p52
        $region18: #{tpu_custom_call.1} parent=15 // pred_check_branch
          %161 = sbr.rel (%p159) target = $region20
        $region19: #{tpu_custom_call.1} parent=15 // pred_region
          %s162 = sand.u32 %s42, 1
          %s163 = scalar_lea.sflag [#allocation4], %s162
          %s164 = sand.u32 %s42, 1
          %s165 = smul.addr %s164, 32
          %s166 = scalar_lea.vmem [#allocation3], %s165
          %s167 = sadd.s32 %s25, %s26
          %169 = vsyncadd %s163, 0
          %s170 = smul.addr %s167, 4
          %s171 = smul.addr %s170, 8
          %s172 = scalar_lea.hbm %s0, %s171
          %s174 = sshll.u32 %s172, 4
          %s175 = int_to_ptr.hbm [resolvable:$true] %s174
          %s176 = sshll.u32 %s166, 4
          %s177 = int_to_ptr.vmem [resolvable:$true] %s176
          %179 = dma.hbm_to_vmem [thread:$0]  %s175, 512, %s177, %s163
        $region20: #{tpu_custom_call.1} parent=15 // pred_fallthru
          _
        // Predicated region
        $region21: #{tpu_custom_call.1} parent=15 // pred_check
          %p180 = pneg %p80
        $region22: #{tpu_custom_call.1} parent=15 // pred_check_branch
          %182 = sbr.rel (%p180) target = $region24
        $region23: #{tpu_custom_call.1} parent=15 // pred_region
          %s183 = sand.u32 %s18, 1
          %s184 = scalar_lea.sflag [#allocation7], %s183
          %s185 = sand.u32 %s70, 1
          %s186 = smul.addr %s185, 32
          %s187 = scalar_lea.vmem [#allocation6], %s186
          %s188 = sadd.s32 %s25, %s26
          %190 = vsyncadd %s184, 0
          %s191 = smul.addr %s188, 4
          %s192 = smul.addr %s191, 8
          %s193 = scalar_lea.hbm %s1, %s192
          %s195 = sshll.u32 %s193, 4
          %s196 = int_to_ptr.hbm [resolvable:$true] %s195
          %s197 = sshll.u32 %s187, 4
          %s198 = int_to_ptr.vmem [resolvable:$true] %s197
          %200 = dma.hbm_to_vmem [thread:$0]  %s196, 512, %s198, %s184
        $region24: #{tpu_custom_call.1} parent=15 // pred_fallthru
          _
        // Predicated region
        $region25: #{tpu_custom_call.1} parent=15 // pred_check
          %p201 = pneg %p108
        $region26: #{tpu_custom_call.1} parent=15 // pred_check_branch
          %203 = sbr.rel (%p201) target = $region28
        $region27: #{tpu_custom_call.1} parent=15 // pred_region
          %s204 = sand.u32 %s18, 1
          %s205 = scalar_lea.sflag [#allocation7], %s204
          %s206 = sand.u32 %s98, 1
          %s207 = smul.addr %s206, 32
          %s208 = scalar_lea.vmem [#allocation8], %s207
          %s209 = sadd.s32 %s25, %s26
          %211 = vsyncadd %s205, 0
          %s212 = smul.addr %s209, 4
          %s213 = smul.addr %s212, 8
          %s214 = scalar_lea.hbm %s2, %s213
          %s216 = sshll.u32 %s214, 4
          %s217 = int_to_ptr.hbm [resolvable:$true] %s216
          %s218 = sshll.u32 %s208, 4
          %s219 = int_to_ptr.vmem [resolvable:$true] %s218
          %221 = dma.hbm_to_vmem [thread:$0]  %s217, 512, %s219, %s205
        $region28: #{tpu_custom_call.1} parent=15 // pred_fallthru
          _
      $region16: #{tpu_custom_call.1} parent=5 // pred_fallthru
        _
      %p222 = scmp.le.s32.totalorder 1, %s18
      %p223 = scmp.lt.s32.totalorder %s18, 3
      %p224 = pnand %p222, %p223
      %p225 = pneg %p224
      // Predicated region
      $region29: #{tpu_custom_call.1} parent=5 // pred_check
        _
      $region30: #{tpu_custom_call.1} parent=5 // pred_check_branch
        %227 = sbr.rel (%p224) target = $region32
      $region31: #{tpu_custom_call.1} parent=5 // pred_region
        %s228 = ssub.s32 %s18, 1
        %s229 = sand.u32 %s45, 1
        %s230 = scalar_lea.sflag [#allocation4], %s229
        %s231 = sand.u32 %s45, 1
        %s232 = smul.addr %s231, 32
        %s233 = scalar_lea.vmem [#allocation3], %s232
        // Predicated region
        $region33: #{tpu_custom_call.1} parent=31 // pred_check
          %p234 = pneg %p58
        $region34: #{tpu_custom_call.1} parent=31 // pred_check_branch
          %236 = sbr.rel (%p234) target = $region36
        $region35: #{tpu_custom_call.1} parent=31 // pred_region
          %238 = dma.done %s230, 512
        $region36: #{tpu_custom_call.1} parent=31 // pred_fallthru
          _
        %s239 = sand.u32 %s23, 1
        %s240 = scalar_lea.sflag [#allocation7], %s239
        %s241 = sand.u32 %s73, 1
        %s242 = smul.addr %s241, 32
        %s243 = scalar_lea.vmem [#allocation6], %s242
        // Predicated region
        $region37: #{tpu_custom_call.1} parent=31 // pred_check
          %p244 = pneg %p86
        $region38: #{tpu_custom_call.1} parent=31 // pred_check_branch
          %246 = sbr.rel (%p244) target = $region40
        $region39: #{tpu_custom_call.1} parent=31 // pred_region
          %248 = dma.done %s240, 512
        $region40: #{tpu_custom_call.1} parent=31 // pred_fallthru
          _
        %s249 = sand.u32 %s23, 1
        %s250 = scalar_lea.sflag [#allocation7], %s249
        %s251 = sand.u32 %s101, 1
        %s252 = smul.addr %s251, 32
        %s253 = scalar_lea.vmem [#allocation8], %s252
        // Predicated region
        $region41: #{tpu_custom_call.1} parent=31 // pred_check
          %p254 = pneg %p114
        $region42: #{tpu_custom_call.1} parent=31 // pred_check_branch
          %256 = sbr.rel (%p254) target = $region44
        $region43: #{tpu_custom_call.1} parent=31 // pred_region
          %258 = dma.done %s250, 512
        $region44: #{tpu_custom_call.1} parent=31 // pred_fallthru
          _
        %s259 = sand.u32 %s45, 1
        %s260 = scalar_lea.sflag [#allocation4], %s259
        %s261 = sand.u32 %s45, 1
        %s262 = smul.addr %s261, 32
        %s263 = scalar_lea.vmem [#allocation3], %s262
        %p264 = pneg %p58
        %p265 = pneg %p55
        %s266 = sand.u32 %s23, 1
        %s267 = scalar_lea.sflag [#allocation7], %s266
        %s268 = sand.u32 %s73, 1
        %s269 = smul.addr %s268, 32
        %s270 = scalar_lea.vmem [#allocation6], %s269
        %p271 = pneg %p86
        %p272 = pneg %p83
        %s273 = sand.u32 %s23, 1
        %s274 = scalar_lea.sflag [#allocation7], %s273
        %s275 = sand.u32 %s101, 1
        %s276 = smul.addr %s275, 32
        %s277 = scalar_lea.vmem [#allocation8], %s276
        %p278 = pneg %p114
        %p279 = pneg %p111
        %p280 = pneg %p140
        %p281 = pneg %p137
        %s282 = sand.u32 %s127, 1
        %s283 = scalar_lea.sflag [#allocation5], %s282
        %s284 = sand.u32 %s127, 1
        %s285 = smul.addr %s284, 8
        %s286 = scalar_lea.vmem [#allocation9], %s285
        %s287 = sadd.s32 %s27, %s28
        %s288 = sadd.s32 %s27, %s28
        %s289 = sadd.s32 %s27, %s28
        %p290 = scmp.eq.s32.totalorder %s28, 0
        // Predicated region
        $region45: #{tpu_custom_call.1} parent=31 // pred_check
          %p291 = pneg %p290
        $region46: #{tpu_custom_call.1} parent=31 // pred_check_branch
          %293 = sbr.rel (%p291) target = $region48
        $region47: #{tpu_custom_call.1} parent=31 // pred_region
          %294 = vst [vmem:[#allocation2] sm:$0xff] 0.0
        $region48: #{tpu_custom_call.1} parent=31 // pred_fallthru
          _
        %v295 = vld [vmem:[%s233] sm:$0xff]
        %v296 = vld [vmem:[%s233 + $0x8] sm:$0xff]
        %v297 = vld [vmem:[%s233 + $0x10] sm:$0xff]
        %v298 = vld [vmem:[%s233 + $0x18] sm:$0xff]
        %v299 = vld [vmem:[%s243] sm:$0xff]
        %v300 = vld [vmem:[%s243 + $0x8] sm:$0xff]
        %v301 = vld [vmem:[%s243 + $0x10] sm:$0xff]
        %v302 = vld [vmem:[%s243 + $0x18] sm:$0xff]
        %v303 = vld [vmem:[%s253] sm:$0xff]
        %v304 = vld [vmem:[%s253 + $0x8] sm:$0xff]
        %v305 = vld [vmem:[%s253 + $0x10] sm:$0xff]
        %v306 = vld [vmem:[%s253 + $0x18] sm:$0xff]
        %v307 = vsub.f32 %v295, %v299
        %v308 = vsub.f32 %v296, %v300
        %v309 = vsub.f32 %v297, %v301
        %v310 = vsub.f32 %v298, %v302
        %v311 = vand.u32 2147483647, %v307
        %v312 = vand.u32 2147483647, %v308
        %v313 = vand.u32 2147483647, %v309
        %v314 = vand.u32 2147483647, %v310
        %v315 = vmul.f32 %v311, %v303
        %v316 = vmul.f32 %v312, %v304
        %v317 = vmul.f32 %v313, %v305
        %v318 = vmul.f32 %v314, %v306
        %v319 = vld [vmem:[#allocation2] ss:$2 sm:$0xf]
        %v320 = vrot.slane %v315, 4
        %v321 = vadd.f32 %v315, %v320
        %v322 = vrot.slane %v321, 2
        %v323 = vadd.f32 %v321, %v322
        %v324 = vrot.slane %v323, 1
        %v325 = vadd.f32 %v323, %v324
        %v326 = vrot.slane %v316, 4
        %v327 = vadd.f32 %v316, %v326
        %v328 = vrot.slane %v327, 2
        %v329 = vadd.f32 %v327, %v328
        %v330 = vrot.slane %v329, 1
        %v331 = vadd.f32 %v329, %v330
        %v332 = vrot.slane %v317, 4
        %v333 = vadd.f32 %v317, %v332
        %v334 = vrot.slane %v333, 2
        %v335 = vadd.f32 %v333, %v334
        %v336 = vrot.slane %v335, 1
        %v337 = vadd.f32 %v335, %v336
        %v338 = vrot.slane %v318, 4
        %v339 = vadd.f32 %v318, %v338
        %v340 = vrot.slane %v339, 2
        %v341 = vadd.f32 %v339, %v340
        %v342 = vrot.slane %v341, 1
        %v343 = vadd.f32 %v341, %v342
        %v348 = vrot.slane %v331, 7
        %v349 = vrot.slane %v337, 6
        %v350 = vrot.slane %v343, 5
        %vm351 = vcmask 1040384
        %v352 = vsel %vm351, %v325, %v348
        %vm353 = vcmask 1042434
        %v354 = vsel %vm353, %v349, %v350
        %vm355 = vcmask 1041408
        %v356 = vsel %vm355, %v352, %v354
        %v358 = vadd.f32 %v319, %v356
        %v359 = vlaneseq
        %vm360 = vcmp.ge.s32.totalorder %v359, 0
        %vm361 = vcmp.lt.s32.totalorder %v359, 512
        %vm362 = vmand %vm360, %vm361
        %363 = vst.msk [vmem:[#allocation2] ss:$2 sm:$0xf] %vm362, %v358
        %s364 = scalar_lea.vmem [#allocation2], 1
        %v365 = vld [vmem:[%s364] ss:$2 sm:$0xf]
        %v366 = vrot.slane %v303, 4
        %v367 = vadd.f32 %v303, %v366
        %v368 = vrot.slane %v367, 2
        %v369 = vadd.f32 %v367, %v368
        %v370 = vrot.slane %v369, 1
        %v371 = vadd.f32 %v369, %v370
        %v372 = vrot.slane %v304, 4
        %v373 = vadd.f32 %v304, %v372
        %v374 = vrot.slane %v373, 2
        %v375 = vadd.f32 %v373, %v374
        %v376 = vrot.slane %v375, 1
        %v377 = vadd.f32 %v375, %v376
        %v378 = vrot.slane %v305, 4
        %v379 = vadd.f32 %v305, %v378
        %v380 = vrot.slane %v379, 2
        %v381 = vadd.f32 %v379, %v380
        %v382 = vrot.slane %v381, 1
        %v383 = vadd.f32 %v381, %v382
        %v384 = vrot.slane %v306, 4
        %v385 = vadd.f32 %v306, %v384
        %v386 = vrot.slane %v385, 2
        %v387 = vadd.f32 %v385, %v386
        %v388 = vrot.slane %v387, 1
        %v389 = vadd.f32 %v387, %v388
        %v394 = vrot.slane %v377, 7
        %v395 = vrot.slane %v383, 6
        %v396 = vrot.slane %v389, 5
        %v397 = vsel %vm351, %v371, %v394
        %v398 = vsel %vm353, %v395, %v396
        %v399 = vsel %vm355, %v397, %v398
        %v401 = vadd.f32 %v365, %v399
        %402 = vst.msk [vmem:[%s364] ss:$2 sm:$0xf] %vm362, %v401
        // Predicated region
        $region49: #{tpu_custom_call.1} parent=31 // pred_check
          %p403 = pneg %p290
        $region50: #{tpu_custom_call.1} parent=31 // pred_check_branch
          %405 = sbr.rel (%p403) target = $region52
        $region51: #{tpu_custom_call.1} parent=31 // pred_region
          %v406 = vld [vmem:[#allocation2] sm:$0xff]
          %407 = vst [vmem:[%s286] sm:$0xff] %v406
        $region52: #{tpu_custom_call.1} parent=31 // pred_fallthru
          _
        %s408 = sand.u32 %s127, 1
        %s409 = scalar_lea.sflag [#allocation5], %s408
        %s410 = sand.u32 %s127, 1
        %s411 = smul.addr %s410, 8
        %s412 = scalar_lea.vmem [#allocation9], %s411
        // Predicated region
        $region53: #{tpu_custom_call.1} parent=31 // pred_check
          %p413 = pneg %p137
        $region54: #{tpu_custom_call.1} parent=31 // pred_check_branch
          %415 = sbr.rel (%p413) target = $region56
        $region55: #{tpu_custom_call.1} parent=31 // pred_region
          %417 = vsyncadd %s409, 0
          %s418 = smul.addr %s27, 4
          %s419 = smul.addr %s418, 2
          %s420 = scalar_lea.hbm %s3, %s419
          %s422 = sshll.u32 %s412, 4
          %s423 = int_to_ptr.vmem [resolvable:$true] %s422
          %s424 = sshll.u32 %s420, 4
          %s425 = int_to_ptr.hbm [resolvable:$true] %s424
          %427 = dma.vmem_to_hbm [thread:$0]  %s423, 128, %s425, %s409
        $region56: #{tpu_custom_call.1} parent=31 // pred_fallthru
          _
      $region32: #{tpu_custom_call.1} parent=5 // pred_fallthru
        _
      %p428 = scmp.le.s32.totalorder 2, %s18
      // Predicated region
      $region57: #{tpu_custom_call.1} parent=5 // pred_check
        %p429 = pneg %p428
      $region58: #{tpu_custom_call.1} parent=5 // pred_check_branch
        %431 = sbr.rel (%p429) target = $region60
      $region59: #{tpu_custom_call.1} parent=5 // pred_region
        %s432 = ssub.s32 %s18, 2
        // Predicated region
        $region61: #{tpu_custom_call.1} parent=59 // pred_check
          %p433 = pneg %p143
        $region62: #{tpu_custom_call.1} parent=59 // pred_check_branch
          %435 = sbr.rel (%p433) target = $region64
        $region63: #{tpu_custom_call.1} parent=59 // pred_region
          %s436 = sand.u32 %s128, 1
          %s437 = scalar_lea.sflag [#allocation5], %s436
          %s438 = sand.u32 %s128, 1
          %s439 = smul.addr %s438, 8
          %s440 = scalar_lea.vmem [#allocation9], %s439
          %442 = dma.done %s437, 128
        $region64: #{tpu_custom_call.1} parent=59 // pred_fallthru
          _
      $region60: #{tpu_custom_call.1} parent=5 // pred_fallthru
        _
    $region6: #{tpu_custom_call.1} parent=1 // loop_footer
      %s22 = sadd.s32 1, %s18
    $region7: #{tpu_custom_call.1} parent=1 // loop_footer_branch
      %17 = sbr.rel target = $region3
    $region8: #{tpu_custom_call.1} parent=1 // loop_exit
      _
    %443 = vsyncpa [#allocation4], 1
    %s444 = scalar_lea.sflag [#allocation4], 1
    %445 = vsyncpa %s444, 1
    %446 = vsyncpa [#allocation7], 1
    %s447 = scalar_lea.sflag [#allocation7], 1
    %448 = vsyncpa %s447, 1
    %449 = vsyncpa [#allocation5], 1
    %s450 = scalar_lea.sflag [#allocation5], 1
    %451 = vsyncpa %s450, 1

</llo_original>
